<compile_context>
chip_gen: v7x
topology: tpu7x:2x2x1
jax: 0.10.0
libtpu: 0.0.40
codegen_flags: <defaults>
</compile_context>

<pallas_src>
import functools

import jax
import jax.numpy as jnp
from jax import lax
from jax.experimental import pallas as pl
from jax.experimental.pallas import tpu as pltpu

_CHUNK_ROWS = 512        # rows processed per inner-loop step of kernel 1
_SEARCH_ITERS = 16       # quad-section steps in kernel 2 (2 bits of bracket each)
_SENTINEL = -2.0         # strictly below any real loss (loss = lse - picked > -1)


def _vmem_capacity_bytes():
    """Per-core VMEM capacity; conservative fallback if the query is unavailable."""
    try:
        cap = int(getattr(pltpu.get_tpu_info(), "vmem_capacity_bytes", 0))
        if cap > 0:
            return cap
    except Exception:
        pass
    return 64 * 1024 * 1024   # v7x per-TensorCore VMEM (smallest current generation)


def _pick_tile(batch, n_classes, itemsize, vmem_cap):
    """Rows per grid step (multiple of 128) + inner chunk size for kernel 1."""
    # VMEM bytes per tile row: pred (C*itemsize) x 2 buffers, plus the lane-padded
    # (tile,1) target/loss blocks (512 B/row/buffer) x 2 arrays x 2 buffers.
    bytes_per_row = 2 * n_classes * itemsize + 4 * 512
    budget = min(int(vmem_cap * 0.4), 40 << 20)
    cap_rows = max(budget // bytes_per_row, 128)
    want_rows = max((1 << 20) // max(n_classes * itemsize, 1), _CHUNK_ROWS)
    tile = min(want_rows, cap_rows, 8192)
    tile = min(tile, ((batch + 127) // 128) * 128)   # never exceed rounded-up batch
    if tile >= _CHUNK_ROWS:
        tile = (tile // _CHUNK_ROWS) * _CHUNK_ROWS
        chunk = _CHUNK_ROWS
    else:
        tile = max((tile // 128) * 128, 128)
        chunk = tile
    return tile, chunk


def _per_row_loss_kernel(pred_ref, tgt_ref, loss_ref, *, batch, chunk):
    """Per-row cross entropy of sigmoid(pred); rows >= batch get _SENTINEL."""
    pid = pl.program_id(0)
    tile_b, num_classes = pred_ref.shape
    n_chunks = tile_b // chunk

    def do_chunk(r0):
        x = pred_ref[pl.ds(r0, chunk), :].astype(jnp.float32)        # (chunk, C)
        s = 0.5 * jnp.tanh(0.5 * x) + 0.5                            # sigmoid, one EUP op
        # s in (0, 1)  =>  exp(s) in (1, e): no max-stabilization needed.
        # TODO(synk): if profiling shows the EUP slot saturated (bf16 inputs on
        # v7x), replace jnp.exp(s) with a VPU minimax polynomial on (0, 1).
        sumexp = jnp.sum(jnp.exp(s), axis=1, keepdims=True)          # (chunk, 1)

        col = lax.broadcasted_iota(jnp.int32, (chunk, num_classes), 1)
        tgt = tgt_ref[pl.ds(r0, chunk), :]                           # (chunk, 1) int32
        picked = jnp.sum(jnp.where(col == tgt, s, jnp.float32(0.0)),
                         axis=1, keepdims=True)                      # (chunk, 1)
        loss = jnp.log(sumexp) - picked                              # (chunk, 1)

        # Ragged last block: rows past the true batch carry undefined pred values
        # (pred is not padded on the host); the select discards them.
        row = (pid * tile_b + r0
               + lax.broadcasted_iota(jnp.int32, (chunk, 1), 0))
        loss_ref[pl.ds(r0, chunk), :] = jnp.where(
            row < batch, loss, jnp.float32(_SENTINEL))

    # TODO(synk): a lane-dense (tile/128, 128) loss layout (in-kernel relayout of
    # the per-row column) would remove the masked (chunk,1) stores; kept column
    # layout here for guaranteed lowering.
    if n_chunks == 1:
        do_chunk(0)
    else:
        def body(r, carry):
            do_chunk(pl.multiple_of(r * chunk, chunk))
            return carry
        lax.fori_loop(0, n_chunks, body, 0)


def _topk_mean_kernel(loss_ref, out_ref, *, keep_num):
    """Mean of the top-keep_num entries of a lane-dense loss slab.

    Fixed-iteration quad-section threshold search: every step shrinks the
    bracket (lo, hi] containing the keep_num-th largest value by 4x while
    maintaining  count(vals > lo) >= keep_num  and  count(vals > hi) < keep_num.
    """
    vals = loss_ref[...]                                 # (R, 128) f32
    kf = jnp.float32(keep_num)

    def count_gt(t):
        # NOTE: f32 counts are exact only up to 2^24 (~16.7M) rows.
        return jnp.sum(jnp.where(vals > t, 1.0, 0.0))

    # All real losses are > -1 (lse > 0, picked in (0,1)); sentinel is -2, so
    # lo0 = sentinel already satisfies count(> lo0) = B >= keep_num.
    lo0 = jnp.float32(_SENTINEL)
    hi0 = jnp.max(vals)

    def body(_, carry):
        lo, hi = carry
        w = hi - lo
        m1 = lo + 0.25 * w
        m2 = lo + 0.50 * w
        m3 = lo + 0.75 * w
        c1 = count_gt(m1)
        c2 = count_gt(m2)
        c3 = count_gt(m3)
        lo_n = jnp.where(c3 >= kf, m3,
                         jnp.where(c2 >= kf, m2,
                                   jnp.where(c1 >= kf, m1, lo)))
        hi_n = jnp.where(c3 >= kf, hi,
                         jnp.where(c2 >= kf, m3,
                                   jnp.where(c1 >= kf, m2, m1)))
        return lo_n, hi_n

    lo, hi = lax.fori_loop(0, _SEARCH_ITERS, body, (lo0, hi0))

    n_above = count_gt(hi)                               # strictly < keep_num
    s_above = jnp.sum(jnp.where(vals > hi, vals, 0.0))
    # The keep_num-th largest value lies in (lo, hi]; ties handled by the
    # correction term below.
    kth = jnp.max(jnp.where((vals > lo) & (vals <= hi), vals, jnp.float32(-3e38)))
    out_ref[0, 0] = (s_above + (kf - n_above) * kth) / kf


def ohem_loss_with_logits(pred, target, rate=0.7):
    """Pallas implementation of OHEMLossWithLogits.forward (loss=None, smoothing_eps=0)."""
    B, C = pred.shape
    keep_num = min(B, int(B * rate))
    assert keep_num >= 1, "keep_num must be >= 1"

    itemsize = jnp.dtype(pred.dtype).itemsize
    vmem_cap = _vmem_capacity_bytes()
    tile_b, chunk = _pick_tile(B, C, itemsize, vmem_cap)
    nb = (B + tile_b - 1) // tile_b
    b_pad = nb * tile_b

    # pred is NOT padded: a jnp.pad would be a full HBM copy of the (B, C) logits.
    # Only the (cheap, B*4-byte) target vector is padded so its blocks are never
    # ragged; the ragged last pred block is handled by the in-kernel row mask.
    tgt = target.astype(jnp.int32)
    if b_pad != B:
        tgt = jnp.pad(tgt, (0, b_pad - B))
    tgt2d = tgt.reshape(b_pad, 1)

    # VMEM footprint of kernel 1's double-buffered blocks (+ margin for spills).
    k1_blocks = 2 * tile_b * C * itemsize + 4 * tile_b * 512
    k1_vmem = int(min(int(vmem_cap * 0.9), k1_blocks + (16 << 20)))

    loss_col = pl.pallas_call(
        functools.partial(_per_row_loss_kernel, batch=B, chunk=chunk),
        out_shape=jax.ShapeDtypeStruct((b_pad, 1), jnp.float32),
        grid_spec=pltpu.PrefetchScalarGridSpec(
            num_scalar_prefetch=0,
            grid=(nb,),
            in_specs=[
                pl.BlockSpec((tile_b, C), lambda i: (i, 0)),
                pl.BlockSpec((tile_b, 1), lambda i: (i, 0)),
            ],
            out_specs=pl.BlockSpec((tile_b, 1), lambda i: (i, 0)),
        ),
        compiler_params=pltpu.CompilerParams(
            dimension_semantics=("parallel",),   # shards the row grid on v7x's 2 TCs
            vmem_limit_bytes=k1_vmem,
        ),
    )(pred, tgt2d)
    # TODO(synk): for very large C add a second ("arbitrary") class grid axis with
    # running (sum-exp, picked) accumulators instead of keeping C whole per tile.

    # Lane-dense slab (free, layout-preserving reshape) for the selection kernel.
    loss_slab = loss_col.reshape(b_pad // 128, 128)

    slab_bytes = b_pad * 4
    k2_vmem = int(min(int(vmem_cap * 0.9), 4 * slab_bytes + (16 << 20)))
    # TODO(synk): for B beyond what fits in one core's VMEM (~12M rows on v7x),
    # block kernel 2 over the slab with per-tile partial counts.

    out = pl.pallas_call(
        functools.partial(_topk_mean_kernel, keep_num=keep_num),
        out_shape=jax.ShapeDtypeStruct((1, 1), jnp.float32),
        in_specs=[pl.BlockSpec(memory_space=pltpu.MemorySpace.VMEM)],
        out_specs=pl.BlockSpec(memory_space=pltpu.MemorySpace.VMEM),
        compiler_params=pltpu.CompilerParams(vmem_limit_bytes=k2_vmem),
    )(loss_slab)
    return out[0, 0]


def _reference(pred, target, rate=0.7):
    """Plain-JAX reference mirroring the PyTorch forward."""
    s = jax.nn.sigmoid(pred.astype(jnp.float32))
    logp = jax.nn.log_softmax(s, axis=1)
    per_sample = -jnp.take_along_axis(
        logp, target.astype(jnp.int32)[:, None], axis=1
    )[:, 0]
    B = pred.shape[0]
    keep_num = min(B, int(B * rate))
    top = jnp.sort(per_sample)[::-1][:keep_num]
    return jnp.sum(top) / keep_num


if __name__ == "__main__":
    k1, k2, k3, k4 = jax.random.split(jax.random.PRNGKey(0), 4)

    # Small, module-sized case (single tile; 8 valid rows inside a 128-row block).
    B, C = 8, 16
    pred = jax.random.normal(k1, (B, C), dtype=jnp.float32)
    target = jax.random.randint(k2, (B,), 0, C, dtype=jnp.int32)
    out = jax.block_until_ready(ohem_loss_with_logits(pred, target, rate=0.7))
    ref = _reference(pred, target, rate=0.7)
    assert jnp.allclose(out, ref, atol=1e-5, rtol=1e-5), (out, ref)

    # Ragged case (B % 128 != 0, unpadded pred) with a bf16 logit stream.
    B2, C2 = 300, 40
    pred2 = jax.random.normal(k3, (B2, C2), dtype=jnp.bfloat16)
    target2 = jax.random.randint(k4, (B2,), 0, C2, dtype=jnp.int32)
    out2 = jax.block_until_ready(ohem_loss_with_logits(pred2, target2, rate=0.7))
    ref2 = _reference(pred2, target2, rate=0.7)
    assert jnp.allclose(out2, ref2, atol=1e-4, rtol=1e-4), (out2, ref2)

    print("KERNEL_OK")
</pallas_src>

<mosaic_0001>
module attributes {stable_mosaic.version = 11 : i64} {
  func.func @_per_row_loss_kernel(%arg0: i32, %arg1: memref<128x16xf32, #tpu.memory_space<vmem>>, %arg2: memref<128x1xi32, #tpu.memory_space<vmem>>, %arg3: memref<128x1xf32, #tpu.memory_space<vmem>>) attributes {dimension_semantics = [#tpu.dimension_semantics<parallel>], iteration_bounds = array<i64: 1>, scalar_prefetch = 0 : i64, scratch_operands = 0 : i64, tpu.core_type = #tpu.core_type<tc>, window_params = [{transform_indices = @transform_0, window_bounds = array<i64: 128, 16>}, {transform_indices = @transform_1, window_bounds = array<i64: 128, 1>}, {transform_indices = @transform_2, window_bounds = array<i64: 128, 1>}]} {
    %c0 = arith.constant 0 : index
    %c0_0 = arith.constant 0 : index
    %0 = vector.load %arg1[%c0, %c0_0] : memref<128x16xf32, #tpu.memory_space<vmem>>, vector<128x16xf32>
    %cst = arith.constant 5.000000e-01 : f32
    %1 = vector.broadcast %cst : f32 to vector<128x16xf32>
    %2 = arith.mulf %1, %0 : vector<128x16xf32>
    %3 = math.tanh %2 : vector<128x16xf32>
    %cst_1 = arith.constant 5.000000e-01 : f32
    %4 = vector.broadcast %cst_1 : f32 to vector<128x16xf32>
    %5 = arith.mulf %4, %3 : vector<128x16xf32>
    %cst_2 = arith.constant 5.000000e-01 : f32
    %6 = vector.broadcast %cst_2 : f32 to vector<128x16xf32>
    %7 = arith.addf %5, %6 : vector<128x16xf32>
    %8 = math.exp %7 : vector<128x16xf32>
    %cst_3 = arith.constant dense<0.000000e+00> : vector<128xf32>
    %9 = vector.multi_reduction <add>, %8, %cst_3 [1] : vector<128x16xf32> to vector<128xf32>
    %10 = vector.shape_cast %9 : vector<128xf32> to vector<128x1xf32>
    %11 = tpu.iota {dimensions = array<i32: 1>} : vector<128x16xi32>
    %c0_4 = arith.constant 0 : index
    %c0_5 = arith.constant 0 : index
    %12 = vector.load %arg2[%c0_4, %c0_5] : memref<128x1xi32, #tpu.memory_space<vmem>>, vector<128x1xi32>
    %13 = vector.broadcast %12 : vector<128x1xi32> to vector<128x16xi32>
    %14 = arith.cmpi eq, %11, %13 : vector<128x16xi32>
    %cst_6 = arith.constant 0.000000e+00 : f32
    %15 = vector.broadcast %cst_6 : f32 to vector<128x16xf32>
    %16 = arith.select %14, %7, %15 : vector<128x16xi1>, vector<128x16xf32>
    %cst_7 = arith.constant dense<0.000000e+00> : vector<128xf32>
    %17 = vector.multi_reduction <add>, %16, %cst_7 [1] : vector<128x16xf32> to vector<128xf32>
    %18 = vector.shape_cast %17 : vector<128xf32> to vector<128x1xf32>
    %19 = math.log %10 : vector<128x1xf32>
    %20 = arith.subf %19, %18 : vector<128x1xf32>
    %c128_i32 = arith.constant 128 : i32
    %21 = arith.muli %arg0, %c128_i32 : i32
    %c0_i32 = arith.constant 0 : i32
    %22 = arith.addi %21, %c0_i32 : i32
    %23 = tpu.iota {dimensions = array<i32: 0>} : vector<128x1xi32>
    %24 = vector.broadcast %22 : i32 to vector<128x1xi32>
    %25 = arith.addi %24, %23 : vector<128x1xi32>
    %c8_i32 = arith.constant 8 : i32
    %26 = vector.broadcast %c8_i32 : i32 to vector<128x1xi32>
    %27 = arith.cmpi slt, %25, %26 : vector<128x1xi32>
    %cst_8 = arith.constant -2.000000e+00 : f32
    %28 = vector.broadcast %cst_8 : f32 to vector<128x1xf32>
    %29 = arith.select %27, %20, %28 : vector<128x1xi1>, vector<128x1xf32>
    %c0_9 = arith.constant 0 : index
    %c0_10 = arith.constant 0 : index
    %30 = vector.load %arg3[%c0_9, %c0_10] : memref<128x1xf32, #tpu.memory_space<vmem>>, vector<128x1xf32>
    tpu.vector_store %arg3[%c0_9, %c0_10], %29 {strides = array<i32>} : memref<128x1xf32, #tpu.memory_space<vmem>>, vector<128x1xf32>,
    return
  }
  func.func @transform_0(%arg0: i32) -> (i32, i32) {
    %c0_i32 = arith.constant 0 : i32
    %c0_i32_0 = arith.constant 0 : i32
    return %arg0, %c0_i32 : i32, i32
  }
  func.func @transform_1(%arg0: i32) -> (i32, i32) {
    %c0_i32 = arith.constant 0 : i32
    %c0_i32_0 = arith.constant 0 : i32
    return %arg0, %c0_i32 : i32, i32
  }
  func.func @transform_2(%arg0: i32) -> (i32, i32) {
    %c0_i32 = arith.constant 0 : i32
    %c0_i32_0 = arith.constant 0 : i32
    return %arg0, %c0_i32 : i32, i32
  }
}

</mosaic_0001>

<llo_original>
// kernel: tpu_custom_call.1
$region0: #{tpu_custom_call.1}
  #allocation0 [shape = 'u32[]', space=smem, size = 0x4, offset = 0x4, fixed_abs, tag = 'smem constant byte address 0x4 - core index']
  #allocation1 [shape = 'u32[144,128]{1,0:T(1,128)}', space=vmem, size = 0x12000, scoped, tag = 'internal scratch']
  %s0 = inlined_call_operand.vmem [shape: f32[8,16], index: 0, kind: input, shape index: {}]
  %s1 = inlined_call_operand.vmem [shape: s32[128,1], index: 1, kind: input, shape index: {}]
  %s2 = inlined_call_operand.vmem [shape: f32[128,1], index: 2, kind: output, shape index: {}]
  %s3 = sld [smem:[#allocation0]]
  $region18: #{tpu_custom_call.1} parent=0
    _
  %s5 = ssub.s32 1, %s3
  %s6 = scalar_select 0, %s5, %s3
  // Predicated region
  $region2: #{tpu_custom_call.1} parent=0 // pred_check
    _
  $region3: #{tpu_custom_call.1} parent=0 // pred_check_branch
    %8 = sbr.rel (0) target = $region5
  $region4: #{tpu_custom_call.1} parent=0 // pred_region
    _
  $region5: #{tpu_custom_call.1} parent=0 // pred_fallthru
    _
  // Predicated region
  $region6: #{tpu_custom_call.1} parent=0 // pred_check
    _
  $region7: #{tpu_custom_call.1} parent=0 // pred_check_branch
    %10 = sbr.rel (0) target = $region9
  $region8: #{tpu_custom_call.1} parent=0 // pred_region
    _
  $region9: #{tpu_custom_call.1} parent=0 // pred_fallthru
    _
  %v11 = vld [vmem:[%s0] sm:$0xff]
  %v12 = vld [vmem:[%s0 + $0x8] sm:$0xff]
  %v13 = vld [vmem:[%s0 + $0x10] sm:$0xff]
  %v14 = vld [vmem:[%s0 + $0x18] sm:$0xff]
  %v15 = vld [vmem:[%s0 + $0x20] sm:$0xff]
  %v16 = vld [vmem:[%s0 + $0x28] sm:$0xff]
  %v17 = vld [vmem:[%s0 + $0x30] sm:$0xff]
  %v18 = vld [vmem:[%s0 + $0x38] sm:$0xff]
  %v19 = vld [vmem:[%s0 + $0x40] sm:$0xff]
  %v20 = vld [vmem:[%s0 + $0x48] sm:$0xff]
  %v21 = vld [vmem:[%s0 + $0x50] sm:$0xff]
  %v22 = vld [vmem:[%s0 + $0x58] sm:$0xff]
  %v23 = vld [vmem:[%s0 + $0x60] sm:$0xff]
  %v24 = vld [vmem:[%s0 + $0x68] sm:$0xff]
  %v25 = vld [vmem:[%s0 + $0x70] sm:$0xff]
  %v26 = vld [vmem:[%s0 + $0x78] sm:$0xff]
  %v27 = vmul.f32 %v11, 0.5
  %v28 = vmul.f32 %v12, 0.5
  %v29 = vmul.f32 %v13, 0.5
  %v30 = vmul.f32 %v14, 0.5
  %v31 = vmul.f32 %v15, 0.5
  %v32 = vmul.f32 %v16, 0.5
  %v33 = vmul.f32 %v17, 0.5
  %v34 = vmul.f32 %v18, 0.5
  %v35 = vmul.f32 %v19, 0.5
  %v36 = vmul.f32 %v20, 0.5
  %v37 = vmul.f32 %v21, 0.5
  %v38 = vmul.f32 %v22, 0.5
  %v39 = vmul.f32 %v23, 0.5
  %v40 = vmul.f32 %v24, 0.5
  %v41 = vmul.f32 %v25, 0.5
  %v42 = vmul.f32 %v26, 0.5
  %v43 = vtanh.pop %v27
  %v44 = vtanh.pop %v28
  %v45 = vtanh.pop %v29
  %v46 = vtanh.pop %v30
  %v47 = vtanh.pop %v31
  %v48 = vtanh.pop %v32
  %v49 = vtanh.pop %v33
  %v50 = vtanh.pop %v34
  %v51 = vtanh.pop %v35
  %v52 = vtanh.pop %v36
  %v53 = vtanh.pop %v37
  %v54 = vtanh.pop %v38
  %v55 = vtanh.pop %v39
  %v56 = vtanh.pop %v40
  %v57 = vtanh.pop %v41
  %v58 = vtanh.pop %v42
  %v59 = vmul.f32 %v43, 0.5
  %v60 = vmul.f32 %v44, 0.5
  %v61 = vmul.f32 %v45, 0.5
  %v62 = vmul.f32 %v46, 0.5
  %v63 = vmul.f32 %v47, 0.5
  %v64 = vmul.f32 %v48, 0.5
  %v65 = vmul.f32 %v49, 0.5
  %v66 = vmul.f32 %v50, 0.5
  %v67 = vmul.f32 %v51, 0.5
  %v68 = vmul.f32 %v52, 0.5
  %v69 = vmul.f32 %v53, 0.5
  %v70 = vmul.f32 %v54, 0.5
  %v71 = vmul.f32 %v55, 0.5
  %v72 = vmul.f32 %v56, 0.5
  %v73 = vmul.f32 %v57, 0.5
  %v74 = vmul.f32 %v58, 0.5
  %v75 = vadd.f32 %v59, 0.5
  %v76 = vadd.f32 %v60, 0.5
  %v77 = vadd.f32 %v61, 0.5
  %v78 = vadd.f32 %v62, 0.5
  %v79 = vadd.f32 %v63, 0.5
  %v80 = vadd.f32 %v64, 0.5
  %v81 = vadd.f32 %v65, 0.5
  %v82 = vadd.f32 %v66, 0.5
  %v83 = vadd.f32 %v67, 0.5
  %v84 = vadd.f32 %v68, 0.5
  %v85 = vadd.f32 %v69, 0.5
  %v86 = vadd.f32 %v70, 0.5
  %v87 = vadd.f32 %v71, 0.5
  %v88 = vadd.f32 %v72, 0.5
  %v89 = vadd.f32 %v73, 0.5
  %v90 = vadd.f32 %v74, 0.5
  %v91 = vmul.f32 %v75, 1.442695
  %v92 = vpow.pop %v91
  %v93 = vmul.f32 %v76, 1.442695
  %v94 = vpow.pop %v93
  %v95 = vmul.f32 %v77, 1.442695
  %v96 = vpow.pop %v95
  %v97 = vmul.f32 %v78, 1.442695
  %v98 = vpow.pop %v97
  %v99 = vmul.f32 %v79, 1.442695
  %v100 = vpow.pop %v99
  %v101 = vmul.f32 %v80, 1.442695
  %v102 = vpow.pop %v101
  %v103 = vmul.f32 %v81, 1.442695
  %v104 = vpow.pop %v103
  %v105 = vmul.f32 %v82, 1.442695
  %v106 = vpow.pop %v105
  %v107 = vmul.f32 %v83, 1.442695
  %v108 = vpow.pop %v107
  %v109 = vmul.f32 %v84, 1.442695
  %v110 = vpow.pop %v109
  %v111 = vmul.f32 %v85, 1.442695
  %v112 = vpow.pop %v111
  %v113 = vmul.f32 %v86, 1.442695
  %v114 = vpow.pop %v113
  %v115 = vmul.f32 %v87, 1.442695
  %v116 = vpow.pop %v115
  %v117 = vmul.f32 %v88, 1.442695
  %v118 = vpow.pop %v117
  %v119 = vmul.f32 %v89, 1.442695
  %v120 = vpow.pop %v119
  %v121 = vmul.f32 %v90, 1.442695
  %v122 = vpow.pop %v121
  %vm123 = vcmask 130048
  %v124 = vsel %vm123, %v92, 0.0
  %125 = vadd.xlane.f32.xlu0 %v124
  %v126 = vpop.xlane.xlu0 %125
  %v127 = vsel %vm123, %v94, 0.0
  %128 = vadd.xlane.f32.xlu0 %v127
  %v129 = vpop.xlane.xlu0 %128
  %v130 = vsel %vm123, %v96, 0.0
  %131 = vadd.xlane.f32.xlu0 %v130
  %v132 = vpop.xlane.xlu0 %131
  %v133 = vsel %vm123, %v98, 0.0
  %134 = vadd.xlane.f32.xlu0 %v133
  %v135 = vpop.xlane.xlu0 %134
  %v136 = vsel %vm123, %v100, 0.0
  %137 = vadd.xlane.f32.xlu0 %v136
  %v138 = vpop.xlane.xlu0 %137
  %v139 = vsel %vm123, %v102, 0.0
  %140 = vadd.xlane.f32.xlu0 %v139
  %v141 = vpop.xlane.xlu0 %140
  %v142 = vsel %vm123, %v104, 0.0
  %143 = vadd.xlane.f32.xlu0 %v142
  %v144 = vpop.xlane.xlu0 %143
  %v145 = vsel %vm123, %v106, 0.0
  %146 = vadd.xlane.f32.xlu0 %v145
  %v147 = vpop.xlane.xlu0 %146
  %v148 = vsel %vm123, %v108, 0.0
  %149 = vadd.xlane.f32.xlu0 %v148
  %v150 = vpop.xlane.xlu0 %149
  %v151 = vsel %vm123, %v110, 0.0
  %152 = vadd.xlane.f32.xlu0 %v151
  %v153 = vpop.xlane.xlu0 %152
  %v154 = vsel %vm123, %v112, 0.0
  %155 = vadd.xlane.f32.xlu0 %v154
  %v156 = vpop.xlane.xlu0 %155
  %v157 = vsel %vm123, %v114, 0.0
  %158 = vadd.xlane.f32.xlu0 %v157
  %v159 = vpop.xlane.xlu0 %158
  %v160 = vsel %vm123, %v116, 0.0
  %161 = vadd.xlane.f32.xlu0 %v160
  %v162 = vpop.xlane.xlu0 %161
  %v163 = vsel %vm123, %v118, 0.0
  %164 = vadd.xlane.f32.xlu0 %v163
  %v165 = vpop.xlane.xlu0 %164
  %v166 = vsel %vm123, %v120, 0.0
  %167 = vadd.xlane.f32.xlu0 %v166
  %v168 = vpop.xlane.xlu0 %167
  %v169 = vsel %vm123, %v122, 0.0
  %170 = vadd.xlane.f32.xlu0 %v169
  %v171 = vpop.xlane.xlu0 %170
  %v172 = vlaneseq
  %v173 = vand.u32 %v172, 127
  %v174 = vld [vmem:[%s1] sm:$0xff]
  %v175 = vld [vmem:[%s1 + $0x8] sm:$0xff]
  %v176 = vld [vmem:[%s1 + $0x10] sm:$0xff]
  %v177 = vld [vmem:[%s1 + $0x18] sm:$0xff]
  %v178 = vld [vmem:[%s1 + $0x20] sm:$0xff]
  %v179 = vld [vmem:[%s1 + $0x28] sm:$0xff]
  %v180 = vld [vmem:[%s1 + $0x30] sm:$0xff]
  %v181 = vld [vmem:[%s1 + $0x38] sm:$0xff]
  %v182 = vld [vmem:[%s1 + $0x40] sm:$0xff]
  %v183 = vld [vmem:[%s1 + $0x48] sm:$0xff]
  %v184 = vld [vmem:[%s1 + $0x50] sm:$0xff]
  %v185 = vld [vmem:[%s1 + $0x58] sm:$0xff]
  %v186 = vld [vmem:[%s1 + $0x60] sm:$0xff]
  %v187 = vld [vmem:[%s1 + $0x68] sm:$0xff]
  %v188 = vld [vmem:[%s1 + $0x70] sm:$0xff]
  %v189 = vld [vmem:[%s1 + $0x78] sm:$0xff]
  %190 = vset.pattern.permute.xlu0 0
  %191 = vperm.xlu0 %190, %v174
  %v192 = vpop.permute.xlu0 %191
  %193 = vset.pattern.permute.xlu0 0
  %194 = vperm.xlu0 %193, %v175
  %v195 = vpop.permute.xlu0 %194
  %196 = vset.pattern.permute.xlu0 0
  %197 = vperm.xlu0 %196, %v176
  %v198 = vpop.permute.xlu0 %197
  %199 = vset.pattern.permute.xlu0 0
  %200 = vperm.xlu0 %199, %v177
  %v201 = vpop.permute.xlu0 %200
  %202 = vset.pattern.permute.xlu0 0
  %203 = vperm.xlu0 %202, %v178
  %v204 = vpop.permute.xlu0 %203
  %205 = vset.pattern.permute.xlu0 0
  %206 = vperm.xlu0 %205, %v179
  %v207 = vpop.permute.xlu0 %206
  %208 = vset.pattern.permute.xlu0 0
  %209 = vperm.xlu0 %208, %v180
  %v210 = vpop.permute.xlu0 %209
  %211 = vset.pattern.permute.xlu0 0
  %212 = vperm.xlu0 %211, %v181
  %v213 = vpop.permute.xlu0 %212
  %214 = vset.pattern.permute.xlu0 0
  %215 = vperm.xlu0 %214, %v182
  %v216 = vpop.permute.xlu0 %215
  %217 = vset.pattern.permute.xlu0 0
  %218 = vperm.xlu0 %217, %v183
  %v219 = vpop.permute.xlu0 %218
  %220 = vset.pattern.permute.xlu0 0
  %221 = vperm.xlu0 %220, %v184
  %v222 = vpop.permute.xlu0 %221
  %223 = vset.pattern.permute.xlu0 0
  %224 = vperm.xlu0 %223, %v185
  %v225 = vpop.permute.xlu0 %224
  %226 = vset.pattern.permute.xlu0 0
  %227 = vperm.xlu0 %226, %v186
  %v228 = vpop.permute.xlu0 %227
  %229 = vset.pattern.permute.xlu0 0
  %230 = vperm.xlu0 %229, %v187
  %v231 = vpop.permute.xlu0 %230
  %232 = vset.pattern.permute.xlu0 0
  %233 = vperm.xlu0 %232, %v188
  %v234 = vpop.permute.xlu0 %233
  %235 = vset.pattern.permute.xlu0 0
  %236 = vperm.xlu0 %235, %v189
  %v237 = vpop.permute.xlu0 %236
  %vm238 = vcmp.eq.s32.totalorder %v173, %v192
  %vm239 = vcmp.eq.s32.totalorder %v173, %v195
  %vm240 = vcmp.eq.s32.totalorder %v173, %v198
  %vm241 = vcmp.eq.s32.totalorder %v173, %v201
  %vm242 = vcmp.eq.s32.totalorder %v173, %v204
  %vm243 = vcmp.eq.s32.totalorder %v173, %v207
  %vm244 = vcmp.eq.s32.totalorder %v173, %v210
  %vm245 = vcmp.eq.s32.totalorder %v173, %v213
  %vm246 = vcmp.eq.s32.totalorder %v173, %v216
  %vm247 = vcmp.eq.s32.totalorder %v173, %v219
  %vm248 = vcmp.eq.s32.totalorder %v173, %v222
  %vm249 = vcmp.eq.s32.totalorder %v173, %v225
  %vm250 = vcmp.eq.s32.totalorder %v173, %v228
  %vm251 = vcmp.eq.s32.totalorder %v173, %v231
  %vm252 = vcmp.eq.s32.totalorder %v173, %v234
  %vm253 = vcmp.eq.s32.totalorder %v173, %v237
  %v254 = vsel %vm238, %v75, 0.0
  %v255 = vsel %vm239, %v76, 0.0
  %v256 = vsel %vm240, %v77, 0.0
  %v257 = vsel %vm241, %v78, 0.0
  %v258 = vsel %vm242, %v79, 0.0
  %v259 = vsel %vm243, %v80, 0.0
  %v260 = vsel %vm244, %v81, 0.0
  %v261 = vsel %vm245, %v82, 0.0
  %v262 = vsel %vm246, %v83, 0.0
  %v263 = vsel %vm247, %v84, 0.0
  %v264 = vsel %vm248, %v85, 0.0
  %v265 = vsel %vm249, %v86, 0.0
  %v266 = vsel %vm250, %v87, 0.0
  %v267 = vsel %vm251, %v88, 0.0
  %v268 = vsel %vm252, %v89, 0.0
  %v269 = vsel %vm253, %v90, 0.0
  %v270 = vsel %vm123, %v254, 0.0
  %271 = vadd.xlane.f32.xlu0 %v270
  %v272 = vpop.xlane.xlu0 %271
  %v273 = vsel %vm123, %v255, 0.0
  %274 = vadd.xlane.f32.xlu0 %v273
  %v275 = vpop.xlane.xlu0 %274
  %v276 = vsel %vm123, %v256, 0.0
  %277 = vadd.xlane.f32.xlu0 %v276
  %v278 = vpop.xlane.xlu0 %277
  %v279 = vsel %vm123, %v257, 0.0
  %280 = vadd.xlane.f32.xlu0 %v279
  %v281 = vpop.xlane.xlu0 %280
  %v282 = vsel %vm123, %v258, 0.0
  %283 = vadd.xlane.f32.xlu0 %v282
  %v284 = vpop.xlane.xlu0 %283
  %v285 = vsel %vm123, %v259, 0.0
  %286 = vadd.xlane.f32.xlu0 %v285
  %v287 = vpop.xlane.xlu0 %286
  %v288 = vsel %vm123, %v260, 0.0
  %289 = vadd.xlane.f32.xlu0 %v288
  %v290 = vpop.xlane.xlu0 %289
  %v291 = vsel %vm123, %v261, 0.0
  %292 = vadd.xlane.f32.xlu0 %v291
  %v293 = vpop.xlane.xlu0 %292
  %v294 = vsel %vm123, %v262, 0.0
  %295 = vadd.xlane.f32.xlu0 %v294
  %v296 = vpop.xlane.xlu0 %295
  %v297 = vsel %vm123, %v263, 0.0
  %298 = vadd.xlane.f32.xlu0 %v297
  %v299 = vpop.xlane.xlu0 %298
  %v300 = vsel %vm123, %v264, 0.0
  %301 = vadd.xlane.f32.xlu0 %v300
  %v302 = vpop.xlane.xlu0 %301
  %v303 = vsel %vm123, %v265, 0.0
  %304 = vadd.xlane.f32.xlu0 %v303
  %v305 = vpop.xlane.xlu0 %304
  %v306 = vsel %vm123, %v266, 0.0
  %307 = vadd.xlane.f32.xlu0 %v306
  %v308 = vpop.xlane.xlu0 %307
  %v309 = vsel %vm123, %v267, 0.0
  %310 = vadd.xlane.f32.xlu0 %v309
  %v311 = vpop.xlane.xlu0 %310
  %v312 = vsel %vm123, %v268, 0.0
  %313 = vadd.xlane.f32.xlu0 %v312
  %v314 = vpop.xlane.xlu0 %313
  %v315 = vsel %vm123, %v269, 0.0
  %316 = vadd.xlane.f32.xlu0 %v315
  %v317 = vpop.xlane.xlu0 %316
  %v318 = vlog2.pop %v126
  %v319 = vmul.f32 %v318, 0.6931472
  %v320 = vlog2.pop %v129
  %v321 = vmul.f32 %v320, 0.6931472
  %v322 = vlog2.pop %v132
  %v323 = vmul.f32 %v322, 0.6931472
  %v324 = vlog2.pop %v135
  %v325 = vmul.f32 %v324, 0.6931472
  %v326 = vlog2.pop %v138
  %v327 = vmul.f32 %v326, 0.6931472
  %v328 = vlog2.pop %v141
  %v329 = vmul.f32 %v328, 0.6931472
  %v330 = vlog2.pop %v144
  %v331 = vmul.f32 %v330, 0.6931472
  %v332 = vlog2.pop %v147
  %v333 = vmul.f32 %v332, 0.6931472
  %v334 = vlog2.pop %v150
  %v335 = vmul.f32 %v334, 0.6931472
  %v336 = vlog2.pop %v153
  %v337 = vmul.f32 %v336, 0.6931472
  %v338 = vlog2.pop %v156
  %v339 = vmul.f32 %v338, 0.6931472
  %v340 = vlog2.pop %v159
  %v341 = vmul.f32 %v340, 0.6931472
  %v342 = vlog2.pop %v162
  %v343 = vmul.f32 %v342, 0.6931472
  %v344 = vlog2.pop %v165
  %v345 = vmul.f32 %v344, 0.6931472
  %v346 = vlog2.pop %v168
  %v347 = vmul.f32 %v346, 0.6931472
  %v348 = vlog2.pop %v171
  %v349 = vmul.f32 %v348, 0.6931472
  %v350 = vsub.f32 %v319, %v272
  %v351 = vsub.f32 %v321, %v275
  %v352 = vsub.f32 %v323, %v278
  %v353 = vsub.f32 %v325, %v281
  %v354 = vsub.f32 %v327, %v284
  %v355 = vsub.f32 %v329, %v287
  %v356 = vsub.f32 %v331, %v290
  %v357 = vsub.f32 %v333, %v293
  %v358 = vsub.f32 %v335, %v296
  %v359 = vsub.f32 %v337, %v299
  %v360 = vsub.f32 %v339, %v302
  %v361 = vsub.f32 %v341, %v305
  %v362 = vsub.f32 %v343, %v308
  %v363 = vsub.f32 %v345, %v311
  %v364 = vsub.f32 %v347, %v314
  %v365 = vsub.f32 %v349, %v317
  %s366 = smul.u32 0, 128
  %v367 = vlaneseq
  %v368 = vshrl.u32 %v367, 7
  %v369 = vadd.s32 %v368, 8
  %v370 = vadd.s32 %v368, 16
  %v371 = vadd.s32 %v368, 24
  %v372 = vadd.s32 %v368, 32
  %v373 = vadd.s32 %v368, 40
  %v374 = vadd.s32 %v368, 48
  %v375 = vadd.s32 %v368, 56
  %v376 = vadd.s32 %v368, 64
  %v377 = vadd.s32 %v368, 72
  %v378 = vadd.s32 %v368, 80
  %v379 = vadd.s32 %v368, 88
  %v380 = vadd.s32 %v368, 96
  %v381 = vadd.s32 %v368, 104
  %v382 = vadd.s32 %v368, 112
  %v383 = vadd.s32 %v368, 120
  %v384 = vstv %s366
  %v385 = vadd.s32 %v384, %v368
  %v386 = vadd.s32 %v384, %v369
  %v387 = vadd.s32 %v384, %v370
  %v388 = vadd.s32 %v384, %v371
  %v389 = vadd.s32 %v384, %v372
  %v390 = vadd.s32 %v384, %v373
  %v391 = vadd.s32 %v384, %v374
  %v392 = vadd.s32 %v384, %v375
  %v393 = vadd.s32 %v384, %v376
  %v394 = vadd.s32 %v384, %v377
  %v395 = vadd.s32 %v384, %v378
  %v396 = vadd.s32 %v384, %v379
  %v397 = vadd.s32 %v384, %v380
  %v398 = vadd.s32 %v384, %v381
  %v399 = vadd.s32 %v384, %v382
  %v400 = vadd.s32 %v384, %v383
  %vm401 = vcmp.lt.s32.totalorder %v385, 8
  %vm402 = vcmp.lt.s32.totalorder %v386, 8
  %vm403 = vcmp.lt.s32.totalorder %v387, 8
  %vm404 = vcmp.lt.s32.totalorder %v388, 8
  %vm405 = vcmp.lt.s32.totalorder %v389, 8
  %vm406 = vcmp.lt.s32.totalorder %v390, 8
  %vm407 = vcmp.lt.s32.totalorder %v391, 8
  %vm408 = vcmp.lt.s32.totalorder %v392, 8
  %vm409 = vcmp.lt.s32.totalorder %v393, 8
  %vm410 = vcmp.lt.s32.totalorder %v394, 8
  %vm411 = vcmp.lt.s32.totalorder %v395, 8
  %vm412 = vcmp.lt.s32.totalorder %v396, 8
  %vm413 = vcmp.lt.s32.totalorder %v397, 8
  %vm414 = vcmp.lt.s32.totalorder %v398, 8
  %vm415 = vcmp.lt.s32.totalorder %v399, 8
  %vm416 = vcmp.lt.s32.totalorder %v400, 8
  %v417 = vsel %vm401, %v350, -2.0
  %v418 = vsel %vm402, %v351, -2.0
  %v419 = vsel %vm403, %v352, -2.0
  %v420 = vsel %vm404, %v353, -2.0
  %v421 = vsel %vm405, %v354, -2.0
  %v422 = vsel %vm406, %v355, -2.0
  %v423 = vsel %vm407, %v356, -2.0
  %v424 = vsel %vm408, %v357, -2.0
  %v425 = vsel %vm409, %v358, -2.0
  %v426 = vsel %vm410, %v359, -2.0
  %v427 = vsel %vm411, %v360, -2.0
  %v428 = vsel %vm412, %v361, -2.0
  %v429 = vsel %vm413, %v362, -2.0
  %v430 = vsel %vm414, %v363, -2.0
  %v431 = vsel %vm415, %v364, -2.0
  %v432 = vsel %vm416, %v365, -2.0
  %vm433 = vcmask 7168
  %434 = vst.msk [vmem:[%s2] sm:$0xff] %vm433, %v417
  %435 = vst.msk [vmem:[%s2 + $0x8] sm:$0xff] %vm433, %v418
  %436 = vst.msk [vmem:[%s2 + $0x10] sm:$0xff] %vm433, %v419
  %437 = vst.msk [vmem:[%s2 + $0x18] sm:$0xff] %vm433, %v420
  %438 = vst.msk [vmem:[%s2 + $0x20] sm:$0xff] %vm433, %v421
  %439 = vst.msk [vmem:[%s2 + $0x28] sm:$0xff] %vm433, %v422
  %440 = vst.msk [vmem:[%s2 + $0x30] sm:$0xff] %vm433, %v423
  %441 = vst.msk [vmem:[%s2 + $0x38] sm:$0xff] %vm433, %v424
  %442 = vst.msk [vmem:[%s2 + $0x40] sm:$0xff] %vm433, %v425
  %443 = vst.msk [vmem:[%s2 + $0x48] sm:$0xff] %vm433, %v426
  %444 = vst.msk [vmem:[%s2 + $0x50] sm:$0xff] %vm433, %v427
  %445 = vst.msk [vmem:[%s2 + $0x58] sm:$0xff] %vm433, %v428
  %446 = vst.msk [vmem:[%s2 + $0x60] sm:$0xff] %vm433, %v429
  %447 = vst.msk [vmem:[%s2 + $0x68] sm:$0xff] %vm433, %v430
  %448 = vst.msk [vmem:[%s2 + $0x70] sm:$0xff] %vm433, %v431
  %449 = vst.msk [vmem:[%s2 + $0x78] sm:$0xff] %vm433, %v432
  // Predicated region
  $region10: #{tpu_custom_call.1} parent=0 // pred_check
    _
  $region11: #{tpu_custom_call.1} parent=0 // pred_check_branch
    %451 = sbr.rel (0) target = $region13
  $region12: #{tpu_custom_call.1} parent=0 // pred_region
    _
  $region13: #{tpu_custom_call.1} parent=0 // pred_fallthru
    _
  // Predicated region
  $region14: #{tpu_custom_call.1} parent=0 // pred_check
    _
  $region15: #{tpu_custom_call.1} parent=0 // pred_check_branch
    %453 = sbr.rel (0) target = $region17
  $region16: #{tpu_custom_call.1} parent=0 // pred_region
    _
  $region17: #{tpu_custom_call.1} parent=0 // pred_fallthru
    _

</llo_original>
